<compile_context>
chip_gen: v7x
topology: tpu7x:2x2x1
jax: 0.10.0
libtpu: 0.0.40
codegen_flags: <defaults>
</compile_context>

<pallas_src>
import functools

import jax
import jax.numpy as jnp
from jax.experimental import pallas as pl
from jax.experimental.pallas import tpu as pltpu

_BN_EPS = 1e-5


def _round_up(x, m):
    return (x + m - 1) // m * m


def _choose_tile(batch, tb_max):
    """Batch-tile size: sublane-8 aligned; 128-aligned and >=2 grid steps for large batches."""
    tb_max = _round_up(max(tb_max, 8), 8)
    if batch > 256:
        # Large batch: keep tiles big (amortize ~0.35us/step pipeline overhead) but ensure the
        # grid has at least 2 steps so v7x's second TensorCore is not left idle.
        return min(tb_max, _round_up(-(-batch // 2), 128))
    return min(tb_max, _round_up(max(batch, 8), 8))


# ---------------------------------------------------------------------------
# Kernel
# ---------------------------------------------------------------------------
def _ncf_kernel(n_fc, out_dims, d_mf, *refs):
    """Fused NCF forward for one batch tile.

    refs layout:
      [0] x_mlp   (TB, d_in0)   concatenated [u_mlp | i_mlp_emb | item_feat], compute dtype
      [1] u_mf    (TB, d_mf)    f32
      [2] i_mf    (TB, d_mf)    concatenated [i_mf_emb | item_feat], f32
      [3 .. 3+n_fc)             per-layer weights W'_l (din_l, dout_l), BN already folded in
      [3+n_fc]    slab          (n_fc+3, pad_w) f32:
                                   rows 0..n_fc-1 : folded biases b'_l
                                   row  n_fc      : BN-scaled logits row for the MLP half
                                   row  n_fc+1    : logits row for the GMF half
                                   row  n_fc+2    : [b_log, 0, ...]
      [4+n_fc]    out_ref       (TB, 1) f32
    """
    f32 = jnp.float32
    x_ref, u_mf_ref, i_mf_ref = refs[0], refs[1], refs[2]
    w_refs = refs[3:3 + n_fc]
    slab_ref = refs[3 + n_fc]
    out_ref = refs[4 + n_fc]

    # MLP tower: relu(x @ W' + b'), one MXU pass per layer (K, N <= 128 here).
    x = x_ref[...]
    for l in range(n_fc):
        w = w_refs[l][...]
        dout = out_dims[l]
        b = slab_ref[l:l + 1, :dout]                       # (1, dout) static slice of the slab
        x = jnp.maximum(jnp.dot(x.astype(w.dtype), w, preferred_element_type=f32) + b, 0.0)

    d_last = out_dims[-1]
    w_mlp_row = slab_ref[n_fc:n_fc + 1, :d_last]           # (1, d_last), last BN folded in
    w_mf_row = slab_ref[n_fc + 1:n_fc + 2, :d_mf]          # (1, d_mf)
    b_log = slab_ref[n_fc + 2:n_fc + 3, 0:1]               # (1, 1)

    # Logits: N=1 "matmuls" as VPU multiply + XLU lane reduction (cheaper than an MXU pass).
    mlp_logit = jnp.sum(x * w_mlp_row, axis=-1, keepdims=True)
    # GMF path, all f32 on the VPU.
    mf = u_mf_ref[...].astype(f32) * i_mf_ref[...].astype(f32)
    mf_logit = jnp.sum(mf * w_mf_row, axis=-1, keepdims=True)

    out_ref[...] = mlp_logit + mf_logit + b_log


# ---------------------------------------------------------------------------
# Parameter preparation: fold eval-mode BatchNorm into adjacent linears, pack
# biases / logits rows into one slab, cast matmul weights to the compute dtype.
# ---------------------------------------------------------------------------
def fold_params(params, compute_dtype=jnp.bfloat16):
    fc = params["fc"]
    n_fc = len(fc)
    d_mf = params["emb_user_mf"].shape[1]                  # embed_size_mf + item_feat_size

    scales, shifts = [], []
    for lyr in fc:
        s = lyr["gamma"][0] * jax.lax.rsqrt(lyr["var"][0] + _BN_EPS)
        t = lyr["beta"][0] - lyr["mean"][0] * s
        scales.append(s)
        shifts.append(t)

    ws, bs = [], []
    for i, lyr in enumerate(fc):
        w = lyr["W"].astype(jnp.float32)
        b = lyr["b"][0].astype(jnp.float32)
        if i > 0:
            # BN of layer i-1 folds into this linear:  (y*s + t) @ W + b
            b = b + shifts[i - 1] @ w
            w = w * scales[i - 1][:, None]
        ws.append(w.astype(compute_dtype))
        bs.append(b)

    # Logits layer: fold the last BN into the MLP half of the logits weight.
    d_last = int(fc[-1]["W"].shape[1])
    w_log = params["logits_W"][:, 0].astype(jnp.float32)
    w_mlp_raw = w_log[:d_last]
    b_log = params["logits_b"][0, 0].astype(jnp.float32) + jnp.dot(shifts[-1], w_mlp_raw)
    w_mlp_row = w_mlp_raw * scales[-1]
    w_mf_row = w_log[d_last:]                               # width d_mf, no split

    out_dims = tuple(int(lyr["W"].shape[1]) for lyr in fc)
    pad_w = max(max(out_dims), int(d_mf), 1)
    slab = jnp.zeros((n_fc + 3, pad_w), jnp.float32)
    for i, b in enumerate(bs):
        slab = slab.at[i, :b.shape[0]].set(b)
    slab = slab.at[n_fc, :d_last].set(w_mlp_row)
    slab = slab.at[n_fc + 1, :d_mf].set(w_mf_row)
    slab = slab.at[n_fc + 2, 0].set(b_log)

    return {
        "weights": ws,            # list of (din, dout) arrays, compute dtype
        "slab": slab,             # (n_fc + 3, pad_w) f32
        "emb_user_mf": params["emb_user_mf"],
        "emb_item_mf": params["emb_item_mf"],
        "emb_user_mlp": params["emb_user_mlp"],
        "emb_item_mlp": params["emb_item_mlp"],
    }


# ---------------------------------------------------------------------------
# Forward wrapper
# ---------------------------------------------------------------------------
def ncf_forward(folded, user_indices, item_indices, item_feat, *, tb_max=2048):
    weights = folded["weights"]
    compute_dtype = weights[0].dtype
    n_fc = len(weights)
    out_dims = tuple(int(w.shape[1]) for w in weights)      # static (from shapes)
    d_mf = int(folded["emb_user_mf"].shape[1])               # static (from shapes)
    batch = user_indices.shape[0]

    # Embedding gathers + concatenations (XLA side; fuse with cast / pad under jit).
    # TODO(synk): move the gathers in-kernel (VMEM-resident tables + scalar-prefetched indices)
    # to cut the gather->HBM->kernel activation round trip in half.
    u_mlp = jnp.take(folded["emb_user_mlp"], user_indices, axis=0)
    i_mlp = jnp.take(folded["emb_item_mlp"], item_indices, axis=0)
    x_mlp = jnp.concatenate([u_mlp, i_mlp, item_feat], axis=-1).astype(compute_dtype)
    # GMF inputs stay f32: the GMF path runs on the VPU in f32 (bf16 would only lose precision).
    u_mf = jnp.take(folded["emb_user_mf"], user_indices, axis=0).astype(jnp.float32)
    i_mf = jnp.concatenate(
        [jnp.take(folded["emb_item_mf"], item_indices, axis=0), item_feat],
        axis=-1).astype(jnp.float32)

    tb = _choose_tile(batch, tb_max)
    b_pad = _round_up(batch, tb)

    def pad(a):
        return jnp.pad(a, ((0, b_pad - batch), (0, 0))) if b_pad != batch else a

    acts = [pad(x_mlp), pad(u_mf), pad(i_mf)]
    consts = list(weights) + [folded["slab"]]

    act_specs = [pl.BlockSpec((tb, a.shape[1]), lambda i: (i, 0)) for a in acts]
    # Constant index_map -> weights/slab stay VMEM-resident across all grid steps.
    const_specs = [pl.BlockSpec(w.shape, lambda i: (0, 0)) for w in consts]
    out_spec = pl.BlockSpec((tb, 1), lambda i: (i, 0))

    kernel = functools.partial(_ncf_kernel, n_fc, out_dims, d_mf)
    out = pl.pallas_call(
        kernel,
        out_shape=jax.ShapeDtypeStruct((b_pad, 1), jnp.float32),
        grid=(b_pad // tb,),
        in_specs=act_specs + const_specs,
        out_specs=out_spec,
        compiler_params=pltpu.CompilerParams(
            dimension_semantics=("parallel",)),   # batch axis -> both TCs on v7x
    )(*acts, *consts)
    # Padded rows carry garbage logits (relu-of-bias etc.); the slice discards them.
    return out[:batch]


# ---------------------------------------------------------------------------
# Parameter init + pure-JAX reference (eval-mode PyTorch semantics)
# ---------------------------------------------------------------------------
def init_params(key, nb_users, nb_items, item_feat_size, layers,
                embed_size_mf, embed_size_mlp):
    full_layers = [2 * (embed_size_mlp + item_feat_size)] + list(layers)
    keys = jax.random.split(key, 8 + 2 * len(full_layers))
    ki = iter(keys)

    def init_w(k, shape):
        fan_in = shape[0]
        return (jax.random.normal(k, shape, jnp.float32) / jnp.sqrt(fan_in)).astype(jnp.float32)

    params = {
        "emb_user_mf": jax.random.normal(next(ki), (nb_users, embed_size_mf + item_feat_size),
                                         jnp.float32) * 0.1,
        "emb_item_mf": jax.random.normal(next(ki), (nb_items, embed_size_mf), jnp.float32) * 0.1,
        "emb_user_mlp": jax.random.normal(next(ki), (nb_users, embed_size_mlp + item_feat_size),
                                          jnp.float32) * 0.1,
        "emb_item_mlp": jax.random.normal(next(ki), (nb_items, embed_size_mlp), jnp.float32) * 0.1,
        "fc": [],
    }
    for din, dout in zip(full_layers[:-1], full_layers[1:]):
        params["fc"].append({
            "W": init_w(next(ki), (din, dout)),
            "b": jax.random.normal(next(ki), (1, dout), jnp.float32) * 0.01,
            "gamma": jnp.ones((1, dout), jnp.float32),
            "beta": jnp.zeros((1, dout), jnp.float32),
            "mean": jnp.zeros((1, dout), jnp.float32),
            "var": jnp.ones((1, dout), jnp.float32),
        })
    d_mf = embed_size_mf + item_feat_size
    params["logits_W"] = init_w(next(ki), (full_layers[-1] + d_mf, 1))
    params["logits_b"] = jax.random.normal(next(ki), (1, 1), jnp.float32) * 0.01
    return params


def ncf_reference(params, user_indices, item_indices, item_feat):
    u_mlp = params["emb_user_mlp"][user_indices]
    i_mlp = jnp.concatenate([params["emb_item_mlp"][item_indices], item_feat], -1)
    u_mf = params["emb_user_mf"][user_indices]
    i_mf = jnp.concatenate([params["emb_item_mf"][item_indices], item_feat], -1)
    mf = u_mf * i_mf
    x = jnp.concatenate([u_mlp, i_mlp], -1)
    for lyr in params["fc"]:
        x = jnp.maximum(jnp.dot(x, lyr["W"], preferred_element_type=jnp.float32) + lyr["b"], 0.0)
        x = (x - lyr["mean"]) * jax.lax.rsqrt(lyr["var"] + _BN_EPS) * lyr["gamma"] + lyr["beta"]
    v = jnp.concatenate([x, mf], -1)
    return jnp.dot(v, params["logits_W"], preferred_element_type=jnp.float32) + params["logits_b"]


if __name__ == "__main__":
    nb_users, nb_items = 32, 48
    item_feat_size = 8
    layers = [64, 32, 16]
    embed_size_mf, embed_size_mlp = 16, 24
    batch = 8

    key = jax.random.PRNGKey(0)
    kp, ku, ki, kf = jax.random.split(key, 4)
    params = init_params(kp, nb_users, nb_items, item_feat_size, layers,
                         embed_size_mf, embed_size_mlp)
    user_indices = jax.random.randint(ku, (batch,), 0, nb_users)
    item_indices = jax.random.randint(ki, (batch,), 0, nb_items)
    item_feat = jax.random.normal(kf, (batch, item_feat_size), jnp.float32)

    ref = ncf_reference(params, user_indices, item_indices, item_feat)

    # --- f32 compute dtype: tight logic check (BN fold / bias slab packing are exact) ---
    folded_f32 = fold_params(params, compute_dtype=jnp.float32)
    fwd = jax.jit(ncf_forward)
    out_f32 = fwd(folded_f32, user_indices, item_indices, item_feat)
    jax.block_until_ready(out_f32)
    assert out_f32.shape == (batch, 1), out_f32.shape
    assert jnp.all(jnp.isfinite(out_f32))
    assert jnp.allclose(out_f32, ref, atol=1e-3, rtol=1e-3), (out_f32, ref)

    # --- bf16 compute dtype (perf configuration: bf16 MXU inputs, f32 accumulation, f32 GMF) ---
    folded_bf16 = fold_params(params, compute_dtype=jnp.bfloat16)
    out_bf16 = fwd(folded_bf16, user_indices, item_indices, item_feat)
    jax.block_until_ready(out_bf16)
    assert jnp.all(jnp.isfinite(out_bf16))
    assert jnp.allclose(out_bf16, ref, atol=5e-2, rtol=5e-2), (out_bf16, ref)

    # --- exercise padding + a multi-step batch grid (B=37, TB=16 -> grid=(3,)) ---
    batch2 = 37
    ku2, ki2, kf2 = jax.random.split(jax.random.PRNGKey(1), 3)
    ui2 = jax.random.randint(ku2, (batch2,), 0, nb_users)
    ii2 = jax.random.randint(ki2, (batch2,), 0, nb_items)
    if2 = jax.random.normal(kf2, (batch2, item_feat_size), jnp.float32)
    fwd_tiled = jax.jit(functools.partial(ncf_forward, tb_max=16))
    out2 = fwd_tiled(folded_f32, ui2, ii2, if2)
    jax.block_until_ready(out2)
    ref2 = ncf_reference(params, ui2, ii2, if2)
    assert out2.shape == (batch2, 1), out2.shape
    assert jnp.allclose(out2, ref2, atol=1e-3, rtol=1e-3), (out2, ref2)

    # --- exercise the large-batch heuristic: B=300 -> TB=256 (128-aligned), grid=(2,) ---
    batch3 = 300
    ku3, ki3, kf3 = jax.random.split(jax.random.PRNGKey(2), 3)
    ui3 = jax.random.randint(ku3, (batch3,), 0, nb_users)
    ii3 = jax.random.randint(ki3, (batch3,), 0, nb_items)
    if3 = jax.random.normal(kf3, (batch3, item_feat_size), jnp.float32)
    out3 = fwd(folded_f32, ui3, ii3, if3)
    jax.block_until_ready(out3)
    ref3 = ncf_reference(params, ui3, ii3, if3)
    assert out3.shape == (batch3, 1), out3.shape
    assert jnp.allclose(out3, ref3, atol=1e-3, rtol=1e-3), (out3, ref3)

    print("KERNEL_OK")
</pallas_src>

<mosaic_0001>
module attributes {stable_mosaic.version = 11 : i64} {
  func.func @_ncf_kernel(%arg0: i32, %arg1: memref<8x64xf32, #tpu.memory_space<vmem>>, %arg2: memref<8x24xf32, #tpu.memory_space<vmem>>, %arg3: memref<8x24xf32, #tpu.memory_space<vmem>>, %arg4: memref<64x64xf32, #tpu.memory_space<vmem>>, %arg5: memref<64x32xf32, #tpu.memory_space<vmem>>, %arg6: memref<32x16xf32, #tpu.memory_space<vmem>>, %arg7: memref<6x64xf32, #tpu.memory_space<vmem>>, %arg8: memref<8x1xf32, #tpu.memory_space<vmem>>) attributes {dimension_semantics = [#tpu.dimension_semantics<parallel>], iteration_bounds = array<i64: 1>, scalar_prefetch = 0 : i64, scratch_operands = 0 : i64, tpu.core_type = #tpu.core_type<tc>, window_params = [{transform_indices = @transform_0, window_bounds = array<i64: 8, 64>}, {transform_indices = @transform_1, window_bounds = array<i64: 8, 24>}, {transform_indices = @transform_2, window_bounds = array<i64: 8, 24>}, {pipeline_mode = #tpu.pipeline_mode<synchronous>, transform_indices = @transform_3, window_bounds = array<i64: 64, 64>}, {pipeline_mode = #tpu.pipeline_mode<synchronous>, transform_indices = @transform_4, window_bounds = array<i64: 64, 32>}, {pipeline_mode = #tpu.pipeline_mode<synchronous>, transform_indices = @transform_5, window_bounds = array<i64: 32, 16>}, {pipeline_mode = #tpu.pipeline_mode<synchronous>, transform_indices = @transform_6, window_bounds = array<i64: 6, 64>}, {transform_indices = @transform_7, window_bounds = array<i64: 8, 1>}]} {
    %c0 = arith.constant 0 : index
    %c0_0 = arith.constant 0 : index
    %0 = vector.load %arg1[%c0, %c0_0] : memref<8x64xf32, #tpu.memory_space<vmem>>, vector<8x64xf32>
    %c0_1 = arith.constant 0 : index
    %c0_2 = arith.constant 0 : index
    %1 = vector.load %arg4[%c0_1, %c0_2] : memref<64x64xf32, #tpu.memory_space<vmem>>, vector<64x64xf32>
    %c0_3 = arith.constant 0 : index
    %c0_4 = arith.constant 0 : index
    %2 = vector.load %arg7[%c0_3, %c0_4] : memref<6x64xf32, #tpu.memory_space<vmem>>, vector<1x64xf32>
    %cst = arith.constant dense<0.000000e+00> : vector<8x64xf32>
    %3 = tpu.matmul %0, %1, %cst {dimension_numbers = #tpu.dot_dimension_numbers<[1], [0], [0], [1], [0, 0, 1, 1], [], []>} : vector<8x64xf32>, vector<64x64xf32>, vector<8x64xf32> -> vector<8x64xf32>
    %4 = vector.broadcast %2 : vector<1x64xf32> to vector<8x64xf32>
    %5 = arith.addf %3, %4 : vector<8x64xf32>
    %cst_5 = arith.constant 0.000000e+00 : f32
    %6 = vector.broadcast %cst_5 : f32 to vector<8x64xf32>
    %7 = arith.maximumf %5, %6 : vector<8x64xf32>
    %c0_6 = arith.constant 0 : index
    %c0_7 = arith.constant 0 : index
    %8 = vector.load %arg5[%c0_6, %c0_7] : memref<64x32xf32, #tpu.memory_space<vmem>>, vector<64x32xf32>
    %c1 = arith.constant 1 : index
    %c0_8 = arith.constant 0 : index
    %9 = vector.load %arg7[%c1, %c0_8] : memref<6x64xf32, #tpu.memory_space<vmem>>, vector<1x32xf32>
    %cst_9 = arith.constant dense<0.000000e+00> : vector<8x32xf32>
    %10 = tpu.matmul %7, %8, %cst_9 {dimension_numbers = #tpu.dot_dimension_numbers<[1], [0], [0], [1], [0, 0, 1, 1], [], []>} : vector<8x64xf32>, vector<64x32xf32>, vector<8x32xf32> -> vector<8x32xf32>
    %11 = vector.broadcast %9 : vector<1x32xf32> to vector<8x32xf32>
    %12 = arith.addf %10, %11 : vector<8x32xf32>
    %cst_10 = arith.constant 0.000000e+00 : f32
    %13 = vector.broadcast %cst_10 : f32 to vector<8x32xf32>
    %14 = arith.maximumf %12, %13 : vector<8x32xf32>
    %c0_11 = arith.constant 0 : index
    %c0_12 = arith.constant 0 : index
    %15 = vector.load %arg6[%c0_11, %c0_12] : memref<32x16xf32, #tpu.memory_space<vmem>>, vector<32x16xf32>
    %c2 = arith.constant 2 : index
    %c0_13 = arith.constant 0 : index
    %16 = vector.load %arg7[%c2, %c0_13] : memref<6x64xf32, #tpu.memory_space<vmem>>, vector<1x16xf32>
    %cst_14 = arith.constant dense<0.000000e+00> : vector<8x16xf32>
    %17 = tpu.matmul %14, %15, %cst_14 {dimension_numbers = #tpu.dot_dimension_numbers<[1], [0], [0], [1], [0, 0, 1, 1], [], []>} : vector<8x32xf32>, vector<32x16xf32>, vector<8x16xf32> -> vector<8x16xf32>
    %18 = vector.broadcast %16 : vector<1x16xf32> to vector<8x16xf32>
    %19 = arith.addf %17, %18 : vector<8x16xf32>
    %cst_15 = arith.constant 0.000000e+00 : f32
    %20 = vector.broadcast %cst_15 : f32 to vector<8x16xf32>
    %21 = arith.maximumf %19, %20 : vector<8x16xf32>
    %c3 = arith.constant 3 : index
    %c0_16 = arith.constant 0 : index
    %22 = vector.load %arg7[%c3, %c0_16] : memref<6x64xf32, #tpu.memory_space<vmem>>, vector<1x16xf32>
    %c4 = arith.constant 4 : index
    %c0_17 = arith.constant 0 : index
    %23 = vector.load %arg7[%c4, %c0_17] : memref<6x64xf32, #tpu.memory_space<vmem>>, vector<1x24xf32>
    %c5 = arith.constant 5 : index
    %c0_18 = arith.constant 0 : index
    %24 = vector.load %arg7[%c5, %c0_18] : memref<6x64xf32, #tpu.memory_space<vmem>>, vector<1x1xf32>
    %25 = vector.broadcast %22 : vector<1x16xf32> to vector<8x16xf32>
    %26 = arith.mulf %21, %25 : vector<8x16xf32>
    %cst_19 = arith.constant dense<0.000000e+00> : vector<8xf32>
    %27 = vector.multi_reduction <add>, %26, %cst_19 [1] : vector<8x16xf32> to vector<8xf32>
    %28 = vector.shape_cast %27 : vector<8xf32> to vector<8x1xf32>
    %c0_20 = arith.constant 0 : index
    %c0_21 = arith.constant 0 : index
    %29 = vector.load %arg2[%c0_20, %c0_21] : memref<8x24xf32, #tpu.memory_space<vmem>>, vector<8x24xf32>
    %c0_22 = arith.constant 0 : index
    %c0_23 = arith.constant 0 : index
    %30 = vector.load %arg3[%c0_22, %c0_23] : memref<8x24xf32, #tpu.memory_space<vmem>>, vector<8x24xf32>
    %31 = arith.mulf %29, %30 : vector<8x24xf32>
    %32 = vector.broadcast %23 : vector<1x24xf32> to vector<8x24xf32>
    %33 = arith.mulf %31, %32 : vector<8x24xf32>
    %cst_24 = arith.constant dense<0.000000e+00> : vector<8xf32>
    %34 = vector.multi_reduction <add>, %33, %cst_24 [1] : vector<8x24xf32> to vector<8xf32>
    %35 = vector.shape_cast %34 : vector<8xf32> to vector<8x1xf32>
    %36 = arith.addf %28, %35 : vector<8x1xf32>
    %37 = vector.broadcast %24 : vector<1x1xf32> to vector<8x1xf32>
    %38 = arith.addf %36, %37 : vector<8x1xf32>
    %c0_25 = arith.constant 0 : index
    %c0_26 = arith.constant 0 : index
    %39 = vector.load %arg8[%c0_25, %c0_26] : memref<8x1xf32, #tpu.memory_space<vmem>>, vector<8x1xf32>
    tpu.vector_store %arg8[%c0_25, %c0_26], %38 {strides = array<i32>} : memref<8x1xf32, #tpu.memory_space<vmem>>, vector<8x1xf32>,
    return
  }
  func.func @transform_0(%arg0: i32) -> (i32, i32) {
    %c0_i32 = arith.constant 0 : i32
    %c0_i32_0 = arith.constant 0 : i32
    return %arg0, %c0_i32 : i32, i32
  }
  func.func @transform_1(%arg0: i32) -> (i32, i32) {
    %c0_i32 = arith.constant 0 : i32
    %c0_i32_0 = arith.constant 0 : i32
    return %arg0, %c0_i32 : i32, i32
  }
  func.func @transform_2(%arg0: i32) -> (i32, i32) {
    %c0_i32 = arith.constant 0 : i32
    %c0_i32_0 = arith.constant 0 : i32
    return %arg0, %c0_i32 : i32, i32
  }
  func.func @transform_3(%arg0: i32) -> (i32, i32) {
    %c0_i32 = arith.constant 0 : i32
    %c0_i32_0 = arith.constant 0 : i32
    %c0_i32_1 = arith.constant 0 : i32
    return %c0_i32, %c0_i32_0 : i32, i32
  }
  func.func @transform_4(%arg0: i32) -> (i32, i32) {
    %c0_i32 = arith.constant 0 : i32
    %c0_i32_0 = arith.constant 0 : i32
    %c0_i32_1 = arith.constant 0 : i32
    return %c0_i32, %c0_i32_0 : i32, i32
  }
  func.func @transform_5(%arg0: i32) -> (i32, i32) {
    %c0_i32 = arith.constant 0 : i32
    %c0_i32_0 = arith.constant 0 : i32
    %c0_i32_1 = arith.constant 0 : i32
    return %c0_i32, %c0_i32_0 : i32, i32
  }
  func.func @transform_6(%arg0: i32) -> (i32, i32) {
    %c0_i32 = arith.constant 0 : i32
    %c0_i32_0 = arith.constant 0 : i32
    %c0_i32_1 = arith.constant 0 : i32
    return %c0_i32, %c0_i32_0 : i32, i32
  }
  func.func @transform_7(%arg0: i32) -> (i32, i32) {
    %c0_i32 = arith.constant 0 : i32
    %c0_i32_0 = arith.constant 0 : i32
    return %arg0, %c0_i32 : i32, i32
  }
}

</mosaic_0001>

<llo_original>
// kernel: ncf_forward.1
$region0: #{ncf_forward.1}
  #allocation0 [shape = 'u32[]', space=smem, size = 0x4, offset = 0x4, fixed_abs, tag = 'smem constant byte address 0x4 - core index']
  #allocation1 [shape = 'u32[144,128]{1,0:T(1,128)}', space=vmem, size = 0x12000, scoped, tag = 'internal scratch']
  %s0 = inlined_call_operand.vmem [shape: f32[8,64], index: 0, kind: input, shape index: {}]
  %s1 = inlined_call_operand.vmem [shape: f32[8,24], index: 1, kind: input, shape index: {}]
  %s2 = inlined_call_operand.vmem [shape: f32[8,24], index: 2, kind: input, shape index: {}]
  %s3 = inlined_call_operand.vmem [shape: f32[64,64], index: 3, kind: input, shape index: {}]
  %s4 = inlined_call_operand.vmem [shape: f32[64,32], index: 4, kind: input, shape index: {}]
  %s5 = inlined_call_operand.vmem [shape: f32[32,16], index: 5, kind: input, shape index: {}]
  %s6 = inlined_call_operand.vmem [shape: f32[6,64], index: 6, kind: input, shape index: {}]
  %s7 = inlined_call_operand.vmem [shape: f32[8,1], index: 7, kind: output, shape index: {}]
  %s8 = sld [smem:[#allocation0]]
  $region38: #{ncf_forward.1} parent=0
    _
  %s10 = ssub.s32 1, %s8
  %s11 = scalar_select 0, %s10, %s8
  // Predicated region
  $region2: #{ncf_forward.1} parent=0 // pred_check
    _
  $region3: #{ncf_forward.1} parent=0 // pred_check_branch
    %13 = sbr.rel (0) target = $region5
  $region4: #{ncf_forward.1} parent=0 // pred_region
    _
  $region5: #{ncf_forward.1} parent=0 // pred_fallthru
    _
  // Predicated region
  $region6: #{ncf_forward.1} parent=0 // pred_check
    _
  $region7: #{ncf_forward.1} parent=0 // pred_check_branch
    %15 = sbr.rel (0) target = $region9
  $region8: #{ncf_forward.1} parent=0 // pred_region
    _
  $region9: #{ncf_forward.1} parent=0 // pred_fallthru
    _
  // Predicated region
  $region10: #{ncf_forward.1} parent=0 // pred_check
    _
  $region11: #{ncf_forward.1} parent=0 // pred_check_branch
    %17 = sbr.rel (0) target = $region13
  $region12: #{ncf_forward.1} parent=0 // pred_region
    _
  $region13: #{ncf_forward.1} parent=0 // pred_fallthru
    _
  // Predicated region
  $region14: #{ncf_forward.1} parent=0 // pred_check
    _
  $region15: #{ncf_forward.1} parent=0 // pred_check_branch
    %19 = sbr.rel (0) target = $region17
  $region16: #{ncf_forward.1} parent=0 // pred_region
    _
  $region17: #{ncf_forward.1} parent=0 // pred_fallthru
    _
  // Predicated region
  $region18: #{ncf_forward.1} parent=0 // pred_check
    _
  $region19: #{ncf_forward.1} parent=0 // pred_check_branch
    %21 = sbr.rel (0) target = $region21
  $region20: #{ncf_forward.1} parent=0 // pred_region
    _
  $region21: #{ncf_forward.1} parent=0 // pred_fallthru
    _
  // Predicated region
  $region22: #{ncf_forward.1} parent=0 // pred_check
    _
  $region23: #{ncf_forward.1} parent=0 // pred_check_branch
    %23 = sbr.rel (0) target = $region25
  $region24: #{ncf_forward.1} parent=0 // pred_region
    _
  $region25: #{ncf_forward.1} parent=0 // pred_fallthru
    _
  // Predicated region
  $region26: #{ncf_forward.1} parent=0 // pred_check
    _
  $region27: #{ncf_forward.1} parent=0 // pred_check_branch
    %25 = sbr.rel (0) target = $region29
  $region28: #{ncf_forward.1} parent=0 // pred_region
    _
  $region29: #{ncf_forward.1} parent=0 // pred_fallthru
    _
  %v26 = vld [vmem:[%s0] sm:$0xff]
  %v27 = vld [vmem:[%s3] sm:$0xff]
  %v28 = vld [vmem:[%s3 + $0x8] sm:$0xff]
  %v29 = vld [vmem:[%s3 + $0x10] sm:$0xff]
  %v30 = vld [vmem:[%s3 + $0x18] sm:$0xff]
  %v31 = vld [vmem:[%s3 + $0x20] sm:$0xff]
  %v32 = vld [vmem:[%s3 + $0x28] sm:$0xff]
  %v33 = vld [vmem:[%s3 + $0x30] sm:$0xff]
  %v34 = vld [vmem:[%s3 + $0x38] sm:$0xff]
  %v35 = vld [vmem:[%s6] sm:$0x1]
  %v36 = vlaneseq
  %v37 = vshrl.u32 %v36, 7
  %v38 = vsub.s32 0, %v37
  %v39 = vrot.slane %v35, %v38
  %vm40 = vcmask 523264
  %v42 = vsel %vm40, %v26, 0
  %44 = vmatprep.subr.mxu0 0.0
  %45 = vmatpush1.msra.mxu0 %v27
  %46 = vmatprep.subr.mxu0 0.0
  %47 = vmatpush1.msra.mxu0 %v28
  %48 = vmatprep.subr.mxu0 0.0
  %49 = vmatpush1.msra.mxu0 %v29
  %50 = vmatprep.subr.mxu0 0.0
  %51 = vmatpush1.msra.mxu0 %v30
  %52 = vmatprep.subr.mxu0 0.0
  %53 = vmatpush1.msra.mxu0 %v31
  %54 = vmatprep.subr.mxu0 0.0
  %55 = vmatpush1.msra.mxu0 %v32
  %56 = vmatprep.subr.mxu0 0.0
  %57 = vmatpush1.msra.mxu0 %v33
  %58 = vmatprep.subr.mxu0 0.0
  %59 = vmatpush1.msra.mxu0 %v34
  %60 = vmatprep.subr.mxu0 0.0
  %61 = vmatpush1.msra.mxu0 0.0
  %62 = vmatprep.subr.mxu0 0.0
  %63 = vmatpush1.msra.mxu0 0.0
  %64 = vmatprep.subr.mxu0 0.0
  %65 = vmatpush1.msra.mxu0 0.0
  %66 = vmatprep.subr.mxu0 0.0
  %67 = vmatpush1.msra.mxu0 0.0
  %68 = vmatprep.subr.mxu0 0.0
  %69 = vmatpush1.msra.mxu0 0.0
  %70 = vmatprep.subr.mxu0 0.0
  %71 = vmatpush1.msra.mxu0 0.0
  %72 = vmatprep.subr.mxu0 0.0
  %73 = vmatpush1.msra.mxu0 0.0
  %74 = vmatprep.subr.mxu0 0.0
  %75 = vmatpush1.msra.mxu0 0.0
  %76 = vmatprep.subr.mxu0 0.0
  %77 = vmatpush1.msra.mxu0 0.0
  %78 = vmatprep.subr.mxu0 0.0
  %79 = vmatpush1.msra.mxu0 0.0
  %80 = vmatprep.subr.mxu0 0.0
  %81 = vmatpush1.msra.mxu0 0.0
  %82 = vmatprep.subr.mxu0 0.0
  %83 = vmatpush1.msra.mxu0 0.0
  %84 = vmatprep.subr.mxu0 0.0
  %85 = vmatpush1.msra.mxu0 0.0
  %86 = vmatprep.subr.mxu0 0.0
  %87 = vmatpush1.msra.mxu0 0.0
  %88 = vmatprep.subr.mxu0 0.0
  %89 = vmatpush1.msra.mxu0 0.0
  %90 = vmatprep.subr.mxu0 0.0
  %91 = vmatpush1.msra.mxu0 0.0
  %92 = vmatprep.subr.mxu0 0.0
  %93 = vmatpush1.msra.mxu0 0.0
  %94 = vmatprep.subr.mxu0 0.0
  %95 = vmatpush1.msra.mxu0 0.0
  %96 = vmatprep.subr.mxu0 0.0
  %97 = vmatpush1.msra.mxu0 0.0
  %98 = vmatprep.subr.mxu0 0.0
  %99 = vmatpush1.msra.mxu0 0.0
  %100 = vmatprep.subr.mxu0 0.0
  %101 = vmatpush1.msra.mxu0 0.0
  %102 = vmatprep.subr.mxu0 0.0
  %103 = vmatpush1.msra.mxu0 0.0
  %104 = vmatprep.subr.mxu0 0.0
  %105 = vmatpush1.msra.mxu0 0.0
  %106 = vmatprep.subr.mxu0 0.0
  %107 = vmatpush1.msra.mxu0 0.0
  %108 = vmatprep.mubr.f32.mxu0 0.0
  %109 = vmatmul.mubr.f32.gmra.mrb[0].mxu0 %v42
  %v110 = vpop.f32.mrb[0].mxu0
  %v111 = vadd.f32 %v39, %v110
  %v112 = vpop.f32.mrb[0].mxu0
  %113 = vdwg.mxu0
  %v114 = vmax.f32 %v111, 0.0
  %v115 = vld [vmem:[%s4] sm:$0xff]
  %v116 = vld [vmem:[%s4 + $0x8] sm:$0xff]
  %v117 = vld [vmem:[%s4 + $0x10] sm:$0xff]
  %v118 = vld [vmem:[%s4 + $0x18] sm:$0xff]
  %v119 = vld [vmem:[%s4 + $0x20] sm:$0xff]
  %v120 = vld [vmem:[%s4 + $0x28] sm:$0xff]
  %v121 = vld [vmem:[%s4 + $0x30] sm:$0xff]
  %v122 = vld [vmem:[%s4 + $0x38] sm:$0xff]
  %v123 = vld [vmem:[%s6 + $0x1] sm:$0x1]
  %v124 = vlaneseq
  %v125 = vshrl.u32 %v124, 7
  %v126 = vsub.s32 0, %v125
  %v127 = vrot.slane %v123, %v126
  %v129 = vsel %vm40, %v114, 0
  %131 = vmatprep.subr.mxu0 0.0
  %132 = vmatpush1.msra.mxu0 %v115
  %133 = vmatprep.subr.mxu0 0.0
  %134 = vmatpush1.msra.mxu0 %v116
  %135 = vmatprep.subr.mxu0 0.0
  %136 = vmatpush1.msra.mxu0 %v117
  %137 = vmatprep.subr.mxu0 0.0
  %138 = vmatpush1.msra.mxu0 %v118
  %139 = vmatprep.subr.mxu0 0.0
  %140 = vmatpush1.msra.mxu0 %v119
  %141 = vmatprep.subr.mxu0 0.0
  %142 = vmatpush1.msra.mxu0 %v120
  %143 = vmatprep.subr.mxu0 0.0
  %144 = vmatpush1.msra.mxu0 %v121
  %145 = vmatprep.subr.mxu0 0.0
  %146 = vmatpush1.msra.mxu0 %v122
  %147 = vmatprep.subr.mxu0 0.0
  %148 = vmatpush1.msra.mxu0 0.0
  %149 = vmatprep.subr.mxu0 0.0
  %150 = vmatpush1.msra.mxu0 0.0
  %151 = vmatprep.subr.mxu0 0.0
  %152 = vmatpush1.msra.mxu0 0.0
  %153 = vmatprep.subr.mxu0 0.0
  %154 = vmatpush1.msra.mxu0 0.0
  %155 = vmatprep.subr.mxu0 0.0
  %156 = vmatpush1.msra.mxu0 0.0
  %157 = vmatprep.subr.mxu0 0.0
  %158 = vmatpush1.msra.mxu0 0.0
  %159 = vmatprep.subr.mxu0 0.0
  %160 = vmatpush1.msra.mxu0 0.0
  %161 = vmatprep.subr.mxu0 0.0
  %162 = vmatpush1.msra.mxu0 0.0
  %163 = vmatprep.subr.mxu0 0.0
  %164 = vmatpush1.msra.mxu0 0.0
  %165 = vmatprep.subr.mxu0 0.0
  %166 = vmatpush1.msra.mxu0 0.0
  %167 = vmatprep.subr.mxu0 0.0
  %168 = vmatpush1.msra.mxu0 0.0
  %169 = vmatprep.subr.mxu0 0.0
  %170 = vmatpush1.msra.mxu0 0.0
  %171 = vmatprep.subr.mxu0 0.0
  %172 = vmatpush1.msra.mxu0 0.0
  %173 = vmatprep.subr.mxu0 0.0
  %174 = vmatpush1.msra.mxu0 0.0
  %175 = vmatprep.subr.mxu0 0.0
  %176 = vmatpush1.msra.mxu0 0.0
  %177 = vmatprep.subr.mxu0 0.0
  %178 = vmatpush1.msra.mxu0 0.0
  %179 = vmatprep.subr.mxu0 0.0
  %180 = vmatpush1.msra.mxu0 0.0
  %181 = vmatprep.subr.mxu0 0.0
  %182 = vmatpush1.msra.mxu0 0.0
  %183 = vmatprep.subr.mxu0 0.0
  %184 = vmatpush1.msra.mxu0 0.0
  %185 = vmatprep.subr.mxu0 0.0
  %186 = vmatpush1.msra.mxu0 0.0
  %187 = vmatprep.subr.mxu0 0.0
  %188 = vmatpush1.msra.mxu0 0.0
  %189 = vmatprep.subr.mxu0 0.0
  %190 = vmatpush1.msra.mxu0 0.0
  %191 = vmatprep.subr.mxu0 0.0
  %192 = vmatpush1.msra.mxu0 0.0
  %193 = vmatprep.subr.mxu0 0.0
  %194 = vmatpush1.msra.mxu0 0.0
  %195 = vmatprep.mubr.f32.mxu0 0.0
  %196 = vmatmul.mubr.f32.gmra.mrb[0].mxu0 %v129
  %v197 = vpop.f32.mrb[0].mxu0
  %v198 = vadd.f32 %v127, %v197
  %v199 = vpop.f32.mrb[0].mxu0
  %200 = vdwg.mxu0
  %v201 = vmax.f32 %v198, 0.0
  %v202 = vld [vmem:[%s5] sm:$0xff]
  %v203 = vld [vmem:[%s5 + $0x8] sm:$0xff]
  %v204 = vld [vmem:[%s5 + $0x10] sm:$0xff]
  %v205 = vld [vmem:[%s5 + $0x18] sm:$0xff]
  %v206 = vld [vmem:[%s6 + $0x2] sm:$0x1]
  %v207 = vlaneseq
  %v208 = vshrl.u32 %v207, 7
  %v209 = vsub.s32 0, %v208
  %v210 = vrot.slane %v206, %v209
  %vm211 = vcmask 261120
  %v213 = vsel %vm211, %v201, 0
  %215 = vmatprep.subr.mxu0 0.0
  %216 = vmatpush1.msra.mxu0 %v202
  %217 = vmatprep.subr.mxu0 0.0
  %218 = vmatpush1.msra.mxu0 %v203
  %219 = vmatprep.subr.mxu0 0.0
  %220 = vmatpush1.msra.mxu0 %v204
  %221 = vmatprep.subr.mxu0 0.0
  %222 = vmatpush1.msra.mxu0 %v205
  %223 = vmatprep.subr.mxu0 0.0
  %224 = vmatpush1.msra.mxu0 0.0
  %225 = vmatprep.subr.mxu0 0.0
  %226 = vmatpush1.msra.mxu0 0.0
  %227 = vmatprep.subr.mxu0 0.0
  %228 = vmatpush1.msra.mxu0 0.0
  %229 = vmatprep.subr.mxu0 0.0
  %230 = vmatpush1.msra.mxu0 0.0
  %231 = vmatprep.subr.mxu0 0.0
  %232 = vmatpush1.msra.mxu0 0.0
  %233 = vmatprep.subr.mxu0 0.0
  %234 = vmatpush1.msra.mxu0 0.0
  %235 = vmatprep.subr.mxu0 0.0
  %236 = vmatpush1.msra.mxu0 0.0
  %237 = vmatprep.subr.mxu0 0.0
  %238 = vmatpush1.msra.mxu0 0.0
  %239 = vmatprep.subr.mxu0 0.0
  %240 = vmatpush1.msra.mxu0 0.0
  %241 = vmatprep.subr.mxu0 0.0
  %242 = vmatpush1.msra.mxu0 0.0
  %243 = vmatprep.subr.mxu0 0.0
  %244 = vmatpush1.msra.mxu0 0.0
  %245 = vmatprep.subr.mxu0 0.0
  %246 = vmatpush1.msra.mxu0 0.0
  %247 = vmatprep.subr.mxu0 0.0
  %248 = vmatpush1.msra.mxu0 0.0
  %249 = vmatprep.subr.mxu0 0.0
  %250 = vmatpush1.msra.mxu0 0.0
  %251 = vmatprep.subr.mxu0 0.0
  %252 = vmatpush1.msra.mxu0 0.0
  %253 = vmatprep.subr.mxu0 0.0
  %254 = vmatpush1.msra.mxu0 0.0
  %255 = vmatprep.subr.mxu0 0.0
  %256 = vmatpush1.msra.mxu0 0.0
  %257 = vmatprep.subr.mxu0 0.0
  %258 = vmatpush1.msra.mxu0 0.0
  %259 = vmatprep.subr.mxu0 0.0
  %260 = vmatpush1.msra.mxu0 0.0
  %261 = vmatprep.subr.mxu0 0.0
  %262 = vmatpush1.msra.mxu0 0.0
  %263 = vmatprep.subr.mxu0 0.0
  %264 = vmatpush1.msra.mxu0 0.0
  %265 = vmatprep.subr.mxu0 0.0
  %266 = vmatpush1.msra.mxu0 0.0
  %267 = vmatprep.subr.mxu0 0.0
  %268 = vmatpush1.msra.mxu0 0.0
  %269 = vmatprep.subr.mxu0 0.0
  %270 = vmatpush1.msra.mxu0 0.0
  %271 = vmatprep.subr.mxu0 0.0
  %272 = vmatpush1.msra.mxu0 0.0
  %273 = vmatprep.subr.mxu0 0.0
  %274 = vmatpush1.msra.mxu0 0.0
  %275 = vmatprep.subr.mxu0 0.0
  %276 = vmatpush1.msra.mxu0 0.0
  %277 = vmatprep.subr.mxu0 0.0
  %278 = vmatpush1.msra.mxu0 0.0
  %279 = vmatprep.mubr.f32.mxu0 0.0
  %280 = vmatmul.mubr.f32.gmra.mrb[0].mxu0 %v213
  %v281 = vpop.f32.mrb[0].mxu0
  %v282 = vadd.f32 %v210, %v281
  %v283 = vpop.f32.mrb[0].mxu0
  %284 = vdwg.mxu0
  %v285 = vmax.f32 %v282, 0.0
  %v286 = vld [vmem:[%s6 + $0x3] sm:$0x1]
  %v287 = vld [vmem:[%s6 + $0x4] sm:$0x1]
  %v288 = vld [vmem:[%s6 + $0x5] sm:$0x1]
  %v289 = vlaneseq
  %v290 = vshrl.u32 %v289, 7
  %v291 = vsub.s32 0, %v290
  %v292 = vrot.slane %v286, %v291
  %v293 = vmul.f32 %v285, %v292
  %vm294 = vcmask 130048
  %v295 = vsel %vm294, %v293, 0.0
  %296 = vadd.xlane.f32.xlu0 %v295
  %v297 = vpop.xlane.xlu0 %296
  %v298 = vld [vmem:[%s1] sm:$0xff]
  %v299 = vld [vmem:[%s2] sm:$0xff]
  %v300 = vmul.f32 %v298, %v299
  %v301 = vlaneseq
  %v302 = vshrl.u32 %v301, 7
  %v303 = vsub.s32 0, %v302
  %v304 = vrot.slane %v287, %v303
  %v305 = vmul.f32 %v300, %v304
  %vm306 = vcmask 195584
  %v307 = vsel %vm306, %v305, 0.0
  %308 = vadd.xlane.f32.xlu0 %v307
  %v309 = vpop.xlane.xlu0 %308
  %v310 = vadd.f32 %v297, %v309
  %v311 = vlaneseq
  %v312 = vshrl.u32 %v311, 7
  %v313 = vsub.s32 0, %v312
  %v314 = vrot.slane %v288, %v313
  %v315 = vadd.f32 %v310, %v314
  %vm316 = vcmask 7168
  %317 = vst.msk [vmem:[%s7] sm:$0xff] %vm316, %v315
  // Predicated region
  $region30: #{ncf_forward.1} parent=0 // pred_check
    _
  $region31: #{ncf_forward.1} parent=0 // pred_check_branch
    %319 = sbr.rel (0) target = $region33
  $region32: #{ncf_forward.1} parent=0 // pred_region
    _
  $region33: #{ncf_forward.1} parent=0 // pred_fallthru
    _
  // Predicated region
  $region34: #{ncf_forward.1} parent=0 // pred_check
    _
  $region35: #{ncf_forward.1} parent=0 // pred_check_branch
    %321 = sbr.rel (0) target = $region37
  $region36: #{ncf_forward.1} parent=0 // pred_region
    _
  $region37: #{ncf_forward.1} parent=0 // pred_fallthru
    _

</llo_original>
